<compile_context>
chip_gen: v7x
topology: tpu7x:2x2x1
jax: 0.10.0
libtpu: 0.0.40
codegen_flags: <defaults>
</compile_context>

<pallas_src>
import jax
import jax.numpy as jnp
from jax.experimental import pallas as pl
from jax.experimental.pallas import tpu as pltpu

_LANE = 128
_SUBLANE = 8  # f32 sublane tile


def _round_up(n: int, m: int) -> int:
    return ((n + m - 1) // m) * m


def _cdiv(a: int, b: int) -> int:
    return -(-a // b)


def _tdnn_kernel(x_ref, w1_ref, b1_ref, w2_ref, b2_ref, o_ref):
    # Layer 1: f32 MXU matmul (K = window_size), bias + ReLU on the VPU.
    x = x_ref[...]                                                   # (TB, W)
    h = jnp.dot(x, w1_ref[...], preferred_element_type=jnp.float32)  # (TB, Hp)
    h = jnp.maximum(h + b1_ref[...], 0.0)
    # Layer 2: f32 MXU matmul (N = output_size), bias, narrow f32 store.
    o = jnp.dot(h, w2_ref[...], preferred_element_type=jnp.float32)  # (TB, O)
    o_ref[...] = (o + b2_ref[...]).astype(o_ref.dtype)


def prepare_tdnn_params(w_td, b_td, w_mlp, b_mlp):
    """One-time parameter prep (hoisted out of the per-call hot path):
    transpose PyTorch-convention weights to (in, out) and zero-pad only the
    hidden dim to a 128-lane multiple. Everything stays f32.
      w_td: (hidden, window), b_td: (hidden,)
      w_mlp: (output, hidden), b_mlp: (output,)
    """
    H, W = w_td.shape
    O = w_mlp.shape[0]
    Hp = _round_up(H, _LANE)

    w1 = jnp.zeros((W, Hp), jnp.float32).at[:, :H].set(
        jnp.asarray(w_td, jnp.float32).T)
    b1 = jnp.zeros((1, Hp), jnp.float32).at[0, :H].set(
        jnp.asarray(b_td, jnp.float32))
    w2 = jnp.zeros((Hp, O), jnp.float32).at[:H, :].set(
        jnp.asarray(w_mlp, jnp.float32).T)
    b2 = jnp.asarray(b_mlp, jnp.float32).reshape(1, O)

    return {"w1": w1, "b1": b1, "w2": w2, "b2": b2, "dims": (W, H, O, Hp)}


def tdnn_forward(x, params, window_size, tile_b=2048):
    """x: (B, T) float32 (or (T,) -> treated as batch of 1).
    Returns o.squeeze(0) exactly like the PyTorch module."""
    W, H, O, Hp = params["dims"]

    x = jnp.asarray(x, jnp.float32)
    if x.ndim == 1:
        x = x[None, :]
    B, T = x.shape
    if T < window_size:
        # Left-pad the time axis with zeros up to window_size
        # (the reference pad_input is buggy; this is its evident intent).
        x = jnp.concatenate(
            [jnp.zeros((B, window_size - T), x.dtype), x], axis=1)
    # TODO(synk): like the PyTorch original, no sliding-window unfold for
    # T > window_size; the module only supports T <= window_size.
    assert x.shape[1] == W == window_size

    # Balanced batch tiling: big tiles amortize ~0.35us/step Pallas overhead,
    # balanced steps keep tail padding tiny, and >=2 steps (when B allows)
    # lets the "parallel" axis shard across both v7x TensorCores.
    n_steps = _cdiv(B, tile_b)
    if n_steps == 1 and B >= 2 * _SUBLANE:
        n_steps = 2
    eff_tile = _round_up(_cdiv(B, n_steps), _SUBLANE)
    Bp = n_steps * eff_tile
    xp = x if Bp == B else jnp.pad(x, ((0, Bp - B), (0, 0)))

    flops = 2 * Bp * (W * Hp + Hp * O)
    bytes_accessed = (
        xp.size * 4
        + (params["w1"].size + params["b1"].size
           + params["w2"].size + params["b2"].size) * 4
        + Bp * O * 4)

    out = pl.pallas_call(
        _tdnn_kernel,
        out_shape=jax.ShapeDtypeStruct((Bp, O), jnp.float32),
        grid=(n_steps,),
        in_specs=[
            # Streamed x tile; last dim == full array dim (no lane padding).
            pl.BlockSpec((eff_tile, W), lambda i: (i, 0)),
            # Grid-invariant (VMEM-resident) weights/biases.
            pl.BlockSpec((W, Hp), lambda i: (0, 0)),
            pl.BlockSpec((1, Hp), lambda i: (0, 0)),
            pl.BlockSpec((Hp, O), lambda i: (0, 0)),
            pl.BlockSpec((1, O), lambda i: (0, 0)),
        ],
        # Narrow output block (last dim == full array dim): 16x fewer bytes
        # than a 128-lane padded slab.
        out_specs=pl.BlockSpec((eff_tile, O), lambda i: (i, 0)),
        compiler_params=pltpu.CompilerParams(
            dimension_semantics=("parallel",),  # megacore sharding on v7x
        ),
        cost_estimate=pl.CostEstimate(
            flops=flops, transcendentals=0, bytes_accessed=bytes_accessed),
    )(xp, params["w1"], params["b1"], params["w2"], params["b2"])

    out = out[:B]
    # Match torch `o.squeeze(0)` semantics.
    return jnp.squeeze(out, axis=0) if B == 1 else out


def init_tdnn_params(key, window_size, hidden_size, output_size):
    """Deterministic init mimicking nn.Linear default U(-1/sqrt(fan_in), 1/sqrt(fan_in))."""
    k1, k2, k3, k4 = jax.random.split(key, 4)
    bound_td = 1.0 / jnp.sqrt(window_size)
    bound_mlp = 1.0 / jnp.sqrt(hidden_size)
    w_td = jax.random.uniform(k1, (hidden_size, window_size), jnp.float32,
                              -bound_td, bound_td)
    b_td = jax.random.uniform(k2, (hidden_size,), jnp.float32,
                              -bound_td, bound_td)
    w_mlp = jax.random.uniform(k3, (output_size, hidden_size), jnp.float32,
                               -bound_mlp, bound_mlp)
    b_mlp = jax.random.uniform(k4, (output_size,), jnp.float32,
                               -bound_mlp, bound_mlp)
    return w_td, b_td, w_mlp, b_mlp


if __name__ == "__main__":
    window_size, hidden_size, output_size = 16, 32, 8
    batch = 2

    key = jax.random.PRNGKey(0)
    kx, kp = jax.random.split(key)
    x = jax.random.normal(kx, (batch, window_size), jnp.float32)
    w_td, b_td, w_mlp, b_mlp = init_tdnn_params(
        kp, window_size, hidden_size, output_size)

    # One-time parameter prep (transpose / hidden-dim pad hoisted out of the
    # per-call path).
    params = prepare_tdnn_params(w_td, b_td, w_mlp, b_mlp)

    out = tdnn_forward(x, params, window_size)
    out = jax.block_until_ready(out)

    # Pure-JAX f32 reference. Kernel is all-f32; the tolerance still covers
    # the case where the MXU uses reduced-precision passes for f32 by default.
    ref = jnp.maximum(x @ w_td.T + b_td, 0.0) @ w_mlp.T + b_mlp
    assert out.shape == (batch, output_size)
    assert jnp.allclose(out, ref, atol=1e-2, rtol=1e-2), (
        jnp.max(jnp.abs(out - ref)))

    print("KERNEL_OK")
</pallas_src>

<mosaic_0001>
module attributes {stable_mosaic.version = 11 : i64} {
  func.func @_tdnn_kernel(%arg0: i32, %arg1: memref<8x16xf32, #tpu.memory_space<vmem>>, %arg2: memref<16x128xf32, #tpu.memory_space<vmem>>, %arg3: memref<1x128xf32, #tpu.memory_space<vmem>>, %arg4: memref<128x8xf32, #tpu.memory_space<vmem>>, %arg5: memref<1x8xf32, #tpu.memory_space<vmem>>, %arg6: memref<8x8xf32, #tpu.memory_space<vmem>>) attributes {dimension_semantics = [#tpu.dimension_semantics<parallel>], iteration_bounds = array<i64: 1>, scalar_prefetch = 0 : i64, scratch_operands = 0 : i64, tpu.core_type = #tpu.core_type<tc>, window_params = [{transform_indices = @transform_0, window_bounds = array<i64: 8, 16>}, {pipeline_mode = #tpu.pipeline_mode<synchronous>, transform_indices = @transform_1, window_bounds = array<i64: 16, 128>}, {pipeline_mode = #tpu.pipeline_mode<synchronous>, transform_indices = @transform_2, window_bounds = array<i64: 1, 128>}, {pipeline_mode = #tpu.pipeline_mode<synchronous>, transform_indices = @transform_3, window_bounds = array<i64: 128, 8>}, {pipeline_mode = #tpu.pipeline_mode<synchronous>, transform_indices = @transform_4, window_bounds = array<i64: 1, 8>}, {transform_indices = @transform_5, window_bounds = array<i64: 8, 8>}]} {
    %c0 = arith.constant 0 : index
    %c0_0 = arith.constant 0 : index
    %0 = vector.load %arg1[%c0, %c0_0] : memref<8x16xf32, #tpu.memory_space<vmem>>, vector<8x16xf32>
    %c0_1 = arith.constant 0 : index
    %c0_2 = arith.constant 0 : index
    %1 = vector.load %arg2[%c0_1, %c0_2] : memref<16x128xf32, #tpu.memory_space<vmem>>, vector<16x128xf32>
    %cst = arith.constant dense<0.000000e+00> : vector<8x128xf32>
    %2 = tpu.matmul %0, %1, %cst {dimension_numbers = #tpu.dot_dimension_numbers<[1], [0], [0], [1], [0, 0, 1, 1], [], []>} : vector<8x16xf32>, vector<16x128xf32>, vector<8x128xf32> -> vector<8x128xf32>
    %c0_3 = arith.constant 0 : index
    %c0_4 = arith.constant 0 : index
    %3 = vector.load %arg3[%c0_3, %c0_4] : memref<1x128xf32, #tpu.memory_space<vmem>>, vector<1x128xf32>
    %4 = vector.broadcast %3 : vector<1x128xf32> to vector<8x128xf32>
    %5 = arith.addf %2, %4 : vector<8x128xf32>
    %cst_5 = arith.constant 0.000000e+00 : f32
    %6 = vector.broadcast %cst_5 : f32 to vector<8x128xf32>
    %7 = arith.maximumf %5, %6 : vector<8x128xf32>
    %c0_6 = arith.constant 0 : index
    %c0_7 = arith.constant 0 : index
    %8 = vector.load %arg4[%c0_6, %c0_7] : memref<128x8xf32, #tpu.memory_space<vmem>>, vector<128x8xf32>
    %cst_8 = arith.constant dense<0.000000e+00> : vector<8x8xf32>
    %9 = tpu.matmul %7, %8, %cst_8 {dimension_numbers = #tpu.dot_dimension_numbers<[1], [0], [0], [1], [0, 0, 1, 1], [], []>} : vector<8x128xf32>, vector<128x8xf32>, vector<8x8xf32> -> vector<8x8xf32>
    %c0_9 = arith.constant 0 : index
    %c0_10 = arith.constant 0 : index
    %10 = vector.load %arg5[%c0_9, %c0_10] : memref<1x8xf32, #tpu.memory_space<vmem>>, vector<1x8xf32>
    %11 = vector.broadcast %10 : vector<1x8xf32> to vector<8x8xf32>
    %12 = arith.addf %9, %11 : vector<8x8xf32>
    %c0_11 = arith.constant 0 : index
    %c0_12 = arith.constant 0 : index
    %13 = vector.load %arg6[%c0_11, %c0_12] : memref<8x8xf32, #tpu.memory_space<vmem>>, vector<8x8xf32>
    tpu.vector_store %arg6[%c0_11, %c0_12], %12 {strides = array<i32>} : memref<8x8xf32, #tpu.memory_space<vmem>>, vector<8x8xf32>,
    return
  }
  func.func @transform_0(%arg0: i32) -> (i32, i32) {
    %c0_i32 = arith.constant 0 : i32
    %c0_i32_0 = arith.constant 0 : i32
    return %arg0, %c0_i32 : i32, i32
  }
  func.func @transform_1(%arg0: i32) -> (i32, i32) {
    %c0_i32 = arith.constant 0 : i32
    %c0_i32_0 = arith.constant 0 : i32
    %c0_i32_1 = arith.constant 0 : i32
    return %c0_i32, %c0_i32_0 : i32, i32
  }
  func.func @transform_2(%arg0: i32) -> (i32, i32) {
    %c0_i32 = arith.constant 0 : i32
    %c0_i32_0 = arith.constant 0 : i32
    %c0_i32_1 = arith.constant 0 : i32
    return %c0_i32, %c0_i32_0 : i32, i32
  }
  func.func @transform_3(%arg0: i32) -> (i32, i32) {
    %c0_i32 = arith.constant 0 : i32
    %c0_i32_0 = arith.constant 0 : i32
    %c0_i32_1 = arith.constant 0 : i32
    return %c0_i32, %c0_i32_0 : i32, i32
  }
  func.func @transform_4(%arg0: i32) -> (i32, i32) {
    %c0_i32 = arith.constant 0 : i32
    %c0_i32_0 = arith.constant 0 : i32
    %c0_i32_1 = arith.constant 0 : i32
    return %c0_i32, %c0_i32_0 : i32, i32
  }
  func.func @transform_5(%arg0: i32) -> (i32, i32) {
    %c0_i32 = arith.constant 0 : i32
    %c0_i32_0 = arith.constant 0 : i32
    return %arg0, %c0_i32 : i32, i32
  }
}

</mosaic_0001>

<llo_original>
// kernel: tpu_custom_call.1
$region0: #{tpu_custom_call.1}
  #allocation0 [shape = 'u32[]', space=smem, size = 0x4, offset = 0x4, fixed_abs, tag = 'smem constant byte address 0x4 - core index']
  #allocation1 [shape = 'u32[144,128]{1,0:T(1,128)}', space=vmem, size = 0x12000, scoped, tag = 'internal scratch']
  %s0 = inlined_call_operand.vmem [shape: f32[8,16], index: 0, kind: input, shape index: {}]
  %s1 = inlined_call_operand.vmem [shape: f32[16,128], index: 1, kind: input, shape index: {}]
  %s2 = inlined_call_operand.vmem [shape: f32[1,128], index: 2, kind: input, shape index: {}]
  %s3 = inlined_call_operand.vmem [shape: f32[128,8], index: 3, kind: input, shape index: {}]
  %s4 = inlined_call_operand.vmem [shape: f32[1,8], index: 4, kind: input, shape index: {}]
  %s5 = inlined_call_operand.hbm [shape: f32[8,8], index: 5, kind: output, shape index: {}]
  %s6 = sld [smem:[#allocation0]]
  $region30: #{tpu_custom_call.1} parent=0
    _
  %s8 = ssub.s32 1, %s6
  %s9 = scalar_select 0, %s8, %s6
  $region1: #{tpu_custom_call.1} parent=0
    #allocation2 [shape = 'u8[4096]{0}', space=vmem, size = 0x1000, scoped, tag = 'output window, operand 0, single buffered']
    #allocation3 [shape = 's32[1]{0}', space=sflag, size = 0x4, scoped, tag = 'scoped memory for tpu_custom_call.1']
    %10 = vsyncpa [#allocation3], 0
    // Predicated region
    $region2: #{tpu_custom_call.1} parent=1 // pred_check
      _
    $region3: #{tpu_custom_call.1} parent=1 // pred_check_branch
      %12 = sbr.rel (0) target = $region5
    $region4: #{tpu_custom_call.1} parent=1 // pred_region
      _
    $region5: #{tpu_custom_call.1} parent=1 // pred_fallthru
      _
    // Predicated region
    $region6: #{tpu_custom_call.1} parent=1 // pred_check
      _
    $region7: #{tpu_custom_call.1} parent=1 // pred_check_branch
      %14 = sbr.rel (0) target = $region9
    $region8: #{tpu_custom_call.1} parent=1 // pred_region
      _
    $region9: #{tpu_custom_call.1} parent=1 // pred_fallthru
      _
    // Predicated region
    $region10: #{tpu_custom_call.1} parent=1 // pred_check
      _
    $region11: #{tpu_custom_call.1} parent=1 // pred_check_branch
      %16 = sbr.rel (0) target = $region13
    $region12: #{tpu_custom_call.1} parent=1 // pred_region
      _
    $region13: #{tpu_custom_call.1} parent=1 // pred_fallthru
      _
    // Predicated region
    $region14: #{tpu_custom_call.1} parent=1 // pred_check
      _
    $region15: #{tpu_custom_call.1} parent=1 // pred_check_branch
      %18 = sbr.rel (0) target = $region17
    $region16: #{tpu_custom_call.1} parent=1 // pred_region
      _
    $region17: #{tpu_custom_call.1} parent=1 // pred_fallthru
      _
    // Predicated region
    $region18: #{tpu_custom_call.1} parent=1 // pred_check
      _
    $region19: #{tpu_custom_call.1} parent=1 // pred_check_branch
      %20 = sbr.rel (0) target = $region21
    $region20: #{tpu_custom_call.1} parent=1 // pred_region
      _
    $region21: #{tpu_custom_call.1} parent=1 // pred_fallthru
      _
    %v21 = vld [vmem:[%s0] sm:$0xff]
    %v22 = vld [vmem:[%s1] sm:$0xff]
    %v23 = vld [vmem:[%s1 + $0x8] sm:$0xff]
    %v24 = vld [vmem:[%s2] sm:$0x1]
    %v26 = vlaneseq
    %v27 = vshrl.u32 %v26, 7
    %v28 = vsub.s32 0, %v27
    %v29 = vrot.slane %v24, %v28
    %vm31 = vcmask 130048
    %v33 = vsel %vm31, %v21, 0
    %35 = vmatprep.subr.mxu0 0.0
    %36 = vmatpush1.msra.mxu0 %v22
    %37 = vmatprep.subr.mxu0 0.0
    %38 = vmatpush1.msra.mxu0 %v23
    %39 = vmatprep.subr.mxu0 0.0
    %40 = vmatpush1.msra.mxu0 0.0
    %41 = vmatprep.subr.mxu0 0.0
    %42 = vmatpush1.msra.mxu0 0.0
    %43 = vmatprep.subr.mxu0 0.0
    %44 = vmatpush1.msra.mxu0 0.0
    %45 = vmatprep.subr.mxu0 0.0
    %46 = vmatpush1.msra.mxu0 0.0
    %47 = vmatprep.subr.mxu0 0.0
    %48 = vmatpush1.msra.mxu0 0.0
    %49 = vmatprep.subr.mxu0 0.0
    %50 = vmatpush1.msra.mxu0 0.0
    %51 = vmatprep.subr.mxu0 0.0
    %52 = vmatpush1.msra.mxu0 0.0
    %53 = vmatprep.subr.mxu0 0.0
    %54 = vmatpush1.msra.mxu0 0.0
    %55 = vmatprep.subr.mxu0 0.0
    %56 = vmatpush1.msra.mxu0 0.0
    %57 = vmatprep.subr.mxu0 0.0
    %58 = vmatpush1.msra.mxu0 0.0
    %59 = vmatprep.subr.mxu0 0.0
    %60 = vmatpush1.msra.mxu0 0.0
    %61 = vmatprep.subr.mxu0 0.0
    %62 = vmatpush1.msra.mxu0 0.0
    %63 = vmatprep.subr.mxu0 0.0
    %64 = vmatpush1.msra.mxu0 0.0
    %65 = vmatprep.subr.mxu0 0.0
    %66 = vmatpush1.msra.mxu0 0.0
    %67 = vmatprep.subr.mxu0 0.0
    %68 = vmatpush1.msra.mxu0 0.0
    %69 = vmatprep.subr.mxu0 0.0
    %70 = vmatpush1.msra.mxu0 0.0
    %71 = vmatprep.subr.mxu0 0.0
    %72 = vmatpush1.msra.mxu0 0.0
    %73 = vmatprep.subr.mxu0 0.0
    %74 = vmatpush1.msra.mxu0 0.0
    %75 = vmatprep.subr.mxu0 0.0
    %76 = vmatpush1.msra.mxu0 0.0
    %77 = vmatprep.subr.mxu0 0.0
    %78 = vmatpush1.msra.mxu0 0.0
    %79 = vmatprep.subr.mxu0 0.0
    %80 = vmatpush1.msra.mxu0 0.0
    %81 = vmatprep.subr.mxu0 0.0
    %82 = vmatpush1.msra.mxu0 0.0
    %83 = vmatprep.subr.mxu0 0.0
    %84 = vmatpush1.msra.mxu0 0.0
    %85 = vmatprep.subr.mxu0 0.0
    %86 = vmatpush1.msra.mxu0 0.0
    %87 = vmatprep.subr.mxu0 0.0
    %88 = vmatpush1.msra.mxu0 0.0
    %89 = vmatprep.subr.mxu0 0.0
    %90 = vmatpush1.msra.mxu0 0.0
    %91 = vmatprep.subr.mxu0 0.0
    %92 = vmatpush1.msra.mxu0 0.0
    %93 = vmatprep.subr.mxu0 0.0
    %94 = vmatpush1.msra.mxu0 0.0
    %95 = vmatprep.subr.mxu0 0.0
    %96 = vmatpush1.msra.mxu0 0.0
    %97 = vmatprep.subr.mxu0 0.0
    %98 = vmatpush1.msra.mxu0 0.0
    %99 = vmatprep.mubr.f32.mxu0 0.0
    %100 = vmatmul.mubr.f32.gmra.mrb[0].mxu0 %v33
    %v101 = vpop.f32.mrb[0].mxu0
    %v102 = vadd.f32 %v29, %v101
    %v103 = vpop.f32.mrb[0].mxu0
    %104 = vdwg.mxu0
    %v105 = vmax.f32 %v102, 0.0
    %v106 = vld [vmem:[%s3] sm:$0xff]
    %v107 = vld [vmem:[%s3 + $0x8] sm:$0xff]
    %v108 = vld [vmem:[%s3 + $0x10] sm:$0xff]
    %v109 = vld [vmem:[%s3 + $0x18] sm:$0xff]
    %v110 = vld [vmem:[%s3 + $0x20] sm:$0xff]
    %v111 = vld [vmem:[%s3 + $0x28] sm:$0xff]
    %v112 = vld [vmem:[%s3 + $0x30] sm:$0xff]
    %v113 = vld [vmem:[%s3 + $0x38] sm:$0xff]
    %v114 = vld [vmem:[%s3 + $0x40] sm:$0xff]
    %v115 = vld [vmem:[%s3 + $0x48] sm:$0xff]
    %v116 = vld [vmem:[%s3 + $0x50] sm:$0xff]
    %v117 = vld [vmem:[%s3 + $0x58] sm:$0xff]
    %v118 = vld [vmem:[%s3 + $0x60] sm:$0xff]
    %v119 = vld [vmem:[%s3 + $0x68] sm:$0xff]
    %v120 = vld [vmem:[%s3 + $0x70] sm:$0xff]
    %v121 = vld [vmem:[%s3 + $0x78] sm:$0xff]
    %v122 = vld [vmem:[%s4] sm:$0x1]
    %v124 = vlaneseq
    %v125 = vshrl.u32 %v124, 7
    %v126 = vsub.s32 0, %v125
    %v127 = vrot.slane %v122, %v126
    %129 = vmatprep.subr.mxu0 0.0
    %130 = vmatpush1.msra.mxu0 %v106
    %131 = vmatprep.subr.mxu0 0.0
    %132 = vmatpush1.msra.mxu0 %v107
    %133 = vmatprep.subr.mxu0 0.0
    %134 = vmatpush1.msra.mxu0 %v108
    %135 = vmatprep.subr.mxu0 0.0
    %136 = vmatpush1.msra.mxu0 %v109
    %137 = vmatprep.subr.mxu0 0.0
    %138 = vmatpush1.msra.mxu0 %v110
    %139 = vmatprep.subr.mxu0 0.0
    %140 = vmatpush1.msra.mxu0 %v111
    %141 = vmatprep.subr.mxu0 0.0
    %142 = vmatpush1.msra.mxu0 %v112
    %143 = vmatprep.subr.mxu0 0.0
    %144 = vmatpush1.msra.mxu0 %v113
    %145 = vmatprep.subr.mxu0 0.0
    %146 = vmatpush1.msra.mxu0 %v114
    %147 = vmatprep.subr.mxu0 0.0
    %148 = vmatpush1.msra.mxu0 %v115
    %149 = vmatprep.subr.mxu0 0.0
    %150 = vmatpush1.msra.mxu0 %v116
    %151 = vmatprep.subr.mxu0 0.0
    %152 = vmatpush1.msra.mxu0 %v117
    %153 = vmatprep.subr.mxu0 0.0
    %154 = vmatpush1.msra.mxu0 %v118
    %155 = vmatprep.subr.mxu0 0.0
    %156 = vmatpush1.msra.mxu0 %v119
    %157 = vmatprep.subr.mxu0 0.0
    %158 = vmatpush1.msra.mxu0 %v120
    %159 = vmatprep.subr.mxu0 0.0
    %160 = vmatpush1.msra.mxu0 %v121
    %161 = vmatprep.subr.mxu0 0.0
    %162 = vmatpush1.msra.mxu0 0.0
    %163 = vmatprep.subr.mxu0 0.0
    %164 = vmatpush1.msra.mxu0 0.0
    %165 = vmatprep.subr.mxu0 0.0
    %166 = vmatpush1.msra.mxu0 0.0
    %167 = vmatprep.subr.mxu0 0.0
    %168 = vmatpush1.msra.mxu0 0.0
    %169 = vmatprep.subr.mxu0 0.0
    %170 = vmatpush1.msra.mxu0 0.0
    %171 = vmatprep.subr.mxu0 0.0
    %172 = vmatpush1.msra.mxu0 0.0
    %173 = vmatprep.subr.mxu0 0.0
    %174 = vmatpush1.msra.mxu0 0.0
    %175 = vmatprep.subr.mxu0 0.0
    %176 = vmatpush1.msra.mxu0 0.0
    %177 = vmatprep.subr.mxu0 0.0
    %178 = vmatpush1.msra.mxu0 0.0
    %179 = vmatprep.subr.mxu0 0.0
    %180 = vmatpush1.msra.mxu0 0.0
    %181 = vmatprep.subr.mxu0 0.0
    %182 = vmatpush1.msra.mxu0 0.0
    %183 = vmatprep.subr.mxu0 0.0
    %184 = vmatpush1.msra.mxu0 0.0
    %185 = vmatprep.subr.mxu0 0.0
    %186 = vmatpush1.msra.mxu0 0.0
    %187 = vmatprep.subr.mxu0 0.0
    %188 = vmatpush1.msra.mxu0 0.0
    %189 = vmatprep.subr.mxu0 0.0
    %190 = vmatpush1.msra.mxu0 0.0
    %191 = vmatprep.subr.mxu0 0.0
    %192 = vmatpush1.msra.mxu0 0.0
    %193 = vmatprep.mubr.f32.mxu0 0.0
    %194 = vmatmul.mubr.f32.gmra.mrb[0].mxu0 %v105
    %v195 = vpop.f32.mrb[0].mxu0
    %v196 = vadd.f32 %v127, %v195
    %v197 = vpop.f32.mrb[0].mxu0
    %198 = vdwg.mxu0
    %vm199 = vcmask 64512
    %200 = vst.msk [vmem:[#allocation2] sm:$0xff] %vm199, %v196
    // Predicated region
    $region22: #{tpu_custom_call.1} parent=1 // pred_check
      _
    $region23: #{tpu_custom_call.1} parent=1 // pred_check_branch
      %202 = sbr.rel (0) target = $region25
    $region24: #{tpu_custom_call.1} parent=1 // pred_region
      %s204 = ssub.s32 128, 128
      %205 = vsyncadd [#allocation3], %s204
      %s207 = sshll.u32 [#allocation2], 4
      %s208 = int_to_ptr.vmem [resolvable:$true] %s207
      %210 = dma.vmem_to_hbm [thread:$0]  %s208, 128, %s5, [#allocation3]
    $region25: #{tpu_custom_call.1} parent=1 // pred_fallthru
      _
    // Predicated region
    $region26: #{tpu_custom_call.1} parent=1 // pred_check
      _
    $region27: #{tpu_custom_call.1} parent=1 // pred_check_branch
      %212 = sbr.rel (0) target = $region29
    $region28: #{tpu_custom_call.1} parent=1 // pred_region
      %213 = dma.done [#allocation3], 128
    $region29: #{tpu_custom_call.1} parent=1 // pred_fallthru
      _
    %214 = vsyncpa [#allocation3], 1

</llo_original>
